<compile_context>
chip_gen: v6e
topology: v6e:2x2x1
jax: 0.10.0
libtpu: 0.0.40
codegen_flags: <defaults>
</compile_context>

<pallas_src>
import functools

import jax
import jax.numpy as jnp
from jax.experimental import pallas as pl
from jax.experimental.pallas import tpu as pltpu


def _round_up(x: int, m: int) -> int:
    return ((x + m - 1) // m) * m


def _pad2d(x, rows, cols):
    return jnp.pad(x, ((0, rows - x.shape[0]), (0, cols - x.shape[1])))


# ----------------------------------------------------------------------------
# Fused kernel: all SAGEConv layers in one invocation. Shapes (all padded):
#   a_ref : [n_hops, NPAD, NPAD]     row-normalized adjacency per layer
#   w_ref : [n_hops, 2*DPAD, DPAD]   stacked [W_self; W_neigh] per layer
#   b_ref : [n_hops, DPAD]           bias per layer
#   h_ref : [NPAD, DPAD]             padded input features
#   o_ref : [NPAD, DPAD]             padded output (real part is [:n_dst, :out_dim])
# ----------------------------------------------------------------------------
def _sagenet_fused_kernel(a_ref, w_ref, b_ref, h_ref, o_ref, *, n_hops: int):
    h = h_ref[...]                                              # [NPAD, DPAD]
    for i in range(n_hops):                                     # static unroll
        # Mean aggregation over source neighbors (MXU, f32 accumulation).
        agg = jnp.dot(a_ref[i], h, preferred_element_type=jnp.float32)
        # Merged self + neighbor branch: one lane-dense MXU matmul with a
        # 2*DPAD contraction instead of two narrow ones.
        x = jnp.concatenate([h, agg], axis=1)                   # [NPAD, 2*DPAD]
        out = jnp.dot(x, w_ref[i], preferred_element_type=jnp.float32)
        out = out + b_ref[pl.ds(i, 1), :]                       # [1, DPAD] broadcast
        h = jnp.maximum(out, 0.0) if i < n_hops - 1 else out    # ReLU between layers
    o_ref[...] = h.astype(o_ref.dtype)


# ----------------------------------------------------------------------------
# Wrapper: host-side padding / weight stacking + single pallas_call.
# ----------------------------------------------------------------------------
def sagenet_forward(blocks_A, input_features, params):
    """blocks_A[i]: [n_dst_i, n_src_i] row-normalized adjacency.
    params[i] = (W_neigh, W_self, bias) with W_* stored [in_dim, out_dim]
    (i.e. PyTorch Linear weight pre-transposed) and bias [1, out_dim]."""
    n_hops = len(params)
    assert len(blocks_A) == n_hops

    node_counts = [input_features.shape[0]] + [A.shape[0] for A in blocks_A]
    feat_dims = [input_features.shape[1]] + [Wn.shape[1] for (Wn, _, _) in params]
    NPAD = _round_up(max(node_counts), 128)   # lane/sublane-dense node axis
    DPAD = _round_up(max(feat_dims), 128)     # lane-dense feature axis

    # Zero padding is mathematically inert: padded A rows/cols are zero, padded
    # feature columns of h are zero, padded weight rows/cols and bias entries
    # are zero, and downstream layers only read real rows/cols of h.
    A_stack = jnp.stack(
        [_pad2d(A.astype(jnp.float32), NPAD, NPAD) for A in blocks_A])
    W_stack = jnp.stack([
        jnp.concatenate([_pad2d(Ws.astype(jnp.float32), DPAD, DPAD),
                         _pad2d(Wn.astype(jnp.float32), DPAD, DPAD)], axis=0)
        for (Wn, Ws, _) in params
    ])                                                   # [n_hops, 2*DPAD, DPAD]
    B_stack = jnp.stack([
        jnp.pad(b.reshape(-1).astype(jnp.float32), (0, DPAD - b.size))
        for (_, _, b) in params
    ])                                                   # [n_hops, DPAD]
    H0 = _pad2d(input_features.astype(jnp.float32), NPAD, DPAD)

    kernel = functools.partial(_sagenet_fused_kernel, n_hops=n_hops)
    out_padded = pl.pallas_call(
        kernel,
        out_shape=jax.ShapeDtypeStruct((NPAD, DPAD), jnp.float32),
        in_specs=[
            pl.BlockSpec((n_hops, NPAD, NPAD), lambda: (0, 0, 0)),
            pl.BlockSpec((n_hops, 2 * DPAD, DPAD), lambda: (0, 0, 0)),
            pl.BlockSpec((n_hops, DPAD), lambda: (0, 0)),
            pl.BlockSpec((NPAD, DPAD), lambda: (0, 0)),
        ],
        out_specs=pl.BlockSpec((NPAD, DPAD), lambda: (0, 0)),
        compiler_params=pltpu.CompilerParams(vmem_limit_bytes=64 << 20),
    )(A_stack, W_stack, B_stack, H0)

    n_dst_final = blocks_A[-1].shape[0]
    out_dim_final = params[-1][0].shape[1]
    return out_padded[:n_dst_final, :out_dim_final]


# Pure-JAX reference (unpadded) for verification.
def sagenet_reference(blocks_A, input_features, params):
    n_hops = len(params)
    h = input_features
    for i, (A, (Wn, Ws, b)) in enumerate(zip(blocks_A, params)):
        n_dst = A.shape[0]
        h_neigh = (A @ h) @ Wn
        h_self = h[:n_dst] @ Ws
        h = h_self + h_neigh + b
        if i < n_hops - 1:
            h = jnp.maximum(h, 0.0)
    return h


def make_block_adjacency(key, n_dst, n_src, edge_prob=0.3):
    """Dense row-normalized mean-aggregation matrix for a synthetic block."""
    adj = (jax.random.uniform(key, (n_dst, n_src)) < edge_prob).astype(jnp.float32)
    deg = adj.sum(axis=1, keepdims=True)
    return adj / jnp.maximum(deg, 1.0)


def init_params(key, n_hops, input_dim, hidden_dim, output_dim):
    """Deterministic weights for each SAGEConv: (W_neigh, W_self, bias),
    stored as [in_dim, out_dim] so the kernel does x @ W."""
    params = []
    for i in range(n_hops):
        in_dim = input_dim if i == 0 else hidden_dim
        out_dim = output_dim if i == n_hops - 1 else hidden_dim
        key, k1, k2, k3 = jax.random.split(key, 4)
        scale = 1.0 / jnp.sqrt(jnp.float32(in_dim))
        Wn = jax.random.normal(k1, (in_dim, out_dim), jnp.float32) * scale
        Ws = jax.random.normal(k2, (in_dim, out_dim), jnp.float32) * scale
        b = jax.random.normal(k3, (1, out_dim), jnp.float32) * 0.01
        params.append((Wn, Ws, b))
    return params


if __name__ == "__main__":
    # Small synthetic problem: 2-hop SageNet.
    n_hops = 2
    input_dim, hidden_dim, output_dim = 8, 32, 16
    n_src0, n_dst0, n_dst1 = 64, 32, 16   # block0: 64->32 nodes, block1: 32->16

    root = jax.random.PRNGKey(0)
    k_feat, k_b0, k_b1, k_par = jax.random.split(root, 4)

    input_features = jax.random.normal(k_feat, (n_src0, input_dim), jnp.float32)
    blocks_A = [
        make_block_adjacency(k_b0, n_dst0, n_src0),   # block 0: dst 32, src 64
        make_block_adjacency(k_b1, n_dst1, n_dst0),   # block 1: dst 16, src 32
    ]
    params = init_params(k_par, n_hops, input_dim, hidden_dim, output_dim)

    out = sagenet_forward(blocks_A, input_features, params)
    out = jax.block_until_ready(out)

    ref = sagenet_reference(blocks_A, input_features, params)
    assert out.shape == (n_dst1, output_dim), out.shape
    assert jnp.allclose(out, ref, atol=1e-4, rtol=1e-4), "mismatch vs reference"

    print("KERNEL_OK")
</pallas_src>

<mosaic_0001>
module attributes {stable_mosaic.version = 11 : i64} {
  func.func @_sagenet_fused_kernel(%arg0: memref<2x128x128xf32, #tpu.memory_space<vmem>>, %arg1: memref<2x256x128xf32, #tpu.memory_space<vmem>>, %arg2: memref<2x128xf32, #tpu.memory_space<vmem>>, %arg3: memref<128x128xf32, #tpu.memory_space<vmem>>, %arg4: memref<128x128xf32, #tpu.memory_space<vmem>>) attributes {dimension_semantics = [], scalar_prefetch = 0 : i64, scratch_operands = 0 : i64, tpu.core_type = #tpu.core_type<tc>} {
    %c0 = arith.constant 0 : index
    %c0_0 = arith.constant 0 : index
    %0 = vector.load %arg3[%c0, %c0_0] : memref<128x128xf32, #tpu.memory_space<vmem>>, vector<128x128xf32>
    %c0_1 = arith.constant 0 : index
    %c0_2 = arith.constant 0 : index
    %c0_3 = arith.constant 0 : index
    %1 = vector.load %arg0[%c0_1, %c0_2, %c0_3] : memref<2x128x128xf32, #tpu.memory_space<vmem>>, vector<1x128x128xf32>
    %2 = vector.shape_cast %1 : vector<1x128x128xf32> to vector<128x128xf32>
    %cst = arith.constant dense<0.000000e+00> : vector<128x128xf32>
    %3 = tpu.matmul %2, %0, %cst {dimension_numbers = #tpu.dot_dimension_numbers<[1], [0], [0], [1], [0, 0, 1, 1], [], []>} : vector<128x128xf32>, vector<128x128xf32>, vector<128x128xf32> -> vector<128x128xf32>
    %4 = tpu.concatenate %0, %3 in 1 : vector<128x128xf32>, vector<128x128xf32> -> vector<128x256xf32>
    %c0_4 = arith.constant 0 : index
    %c0_5 = arith.constant 0 : index
    %c0_6 = arith.constant 0 : index
    %5 = vector.load %arg1[%c0_4, %c0_5, %c0_6] : memref<2x256x128xf32, #tpu.memory_space<vmem>>, vector<1x256x128xf32>
    %6 = vector.shape_cast %5 : vector<1x256x128xf32> to vector<256x128xf32>
    %cst_7 = arith.constant dense<0.000000e+00> : vector<128x128xf32>
    %7 = tpu.matmul %4, %6, %cst_7 {dimension_numbers = #tpu.dot_dimension_numbers<[1], [0], [0], [1], [0, 0, 1, 1], [], []>} : vector<128x256xf32>, vector<256x128xf32>, vector<128x128xf32> -> vector<128x128xf32>
    %c0_8 = arith.constant 0 : index
    %c0_9 = arith.constant 0 : index
    %8 = vector.load %arg2[%c0_8, %c0_9] : memref<2x128xf32, #tpu.memory_space<vmem>>, vector<1x128xf32>
    %9 = vector.broadcast %8 : vector<1x128xf32> to vector<128x128xf32>
    %10 = arith.addf %7, %9 : vector<128x128xf32>
    %cst_10 = arith.constant 0.000000e+00 : f32
    %11 = vector.broadcast %cst_10 : f32 to vector<128x128xf32>
    %12 = arith.maximumf %10, %11 : vector<128x128xf32>
    %c1 = arith.constant 1 : index
    %c0_11 = arith.constant 0 : index
    %c0_12 = arith.constant 0 : index
    %13 = vector.load %arg0[%c1, %c0_11, %c0_12] : memref<2x128x128xf32, #tpu.memory_space<vmem>>, vector<1x128x128xf32>
    %14 = vector.shape_cast %13 : vector<1x128x128xf32> to vector<128x128xf32>
    %cst_13 = arith.constant dense<0.000000e+00> : vector<128x128xf32>
    %15 = tpu.matmul %14, %12, %cst_13 {dimension_numbers = #tpu.dot_dimension_numbers<[1], [0], [0], [1], [0, 0, 1, 1], [], []>} : vector<128x128xf32>, vector<128x128xf32>, vector<128x128xf32> -> vector<128x128xf32>
    %16 = tpu.concatenate %12, %15 in 1 : vector<128x128xf32>, vector<128x128xf32> -> vector<128x256xf32>
    %c1_14 = arith.constant 1 : index
    %c0_15 = arith.constant 0 : index
    %c0_16 = arith.constant 0 : index
    %17 = vector.load %arg1[%c1_14, %c0_15, %c0_16] : memref<2x256x128xf32, #tpu.memory_space<vmem>>, vector<1x256x128xf32>
    %18 = vector.shape_cast %17 : vector<1x256x128xf32> to vector<256x128xf32>
    %cst_17 = arith.constant dense<0.000000e+00> : vector<128x128xf32>
    %19 = tpu.matmul %16, %18, %cst_17 {dimension_numbers = #tpu.dot_dimension_numbers<[1], [0], [0], [1], [0, 0, 1, 1], [], []>} : vector<128x256xf32>, vector<256x128xf32>, vector<128x128xf32> -> vector<128x128xf32>
    %c1_18 = arith.constant 1 : index
    %c0_19 = arith.constant 0 : index
    %20 = vector.load %arg2[%c1_18, %c0_19] : memref<2x128xf32, #tpu.memory_space<vmem>>, vector<1x128xf32>
    %21 = vector.broadcast %20 : vector<1x128xf32> to vector<128x128xf32>
    %22 = arith.addf %19, %21 : vector<128x128xf32>
    %c0_20 = arith.constant 0 : index
    %c0_21 = arith.constant 0 : index
    %23 = vector.load %arg4[%c0_20, %c0_21] : memref<128x128xf32, #tpu.memory_space<vmem>>, vector<128x128xf32>
    tpu.vector_store %arg4[%c0_20, %c0_21], %22 {strides = array<i32>} : memref<128x128xf32, #tpu.memory_space<vmem>>, vector<128x128xf32>,
    return
  }
}

</mosaic_0001>

<llo_original>
// kernel: tpu_custom_call.1
$region0: #{tpu_custom_call.1}
  #allocation0 [shape = 'u32[]', space=smem, size = 0x4, offset = 0x4, fixed_abs, tag = 'smem constant byte address 0x4 - core index']
  #allocation1 [shape = 'u32[144,128]{1,0:T(1,128)}', space=vmem, size = 0x12000, scoped, tag = 'internal scratch']
  %s0 = inlined_call_operand.hbm [shape: f32[2,128,128], index: 0, kind: input, shape index: {}]
  %s1 = inlined_call_operand.hbm [shape: f32[2,256,128], index: 1, kind: input, shape index: {}]
  %s2 = inlined_call_operand.vmem [shape: f32[2,128], index: 2, kind: input, shape index: {}]
  %s3 = inlined_call_operand.hbm [shape: f32[128,128], index: 3, kind: input, shape index: {}]
  %s4 = inlined_call_operand.hbm [shape: f32[128,128], index: 4, kind: output, shape index: {}]
  %s5 = sld [smem:[#allocation0]]
  $region38: #{tpu_custom_call.1} parent=0
    _
  %s7 = ssub.s32 1, %s5
  %s8 = scalar_select 0, %s7, %s5
  $region1: #{tpu_custom_call.1} parent=0
    #allocation2 [shape = 'u8[131072]{0}', space=vmem, size = 0x20000, scoped, tag = 'input window, operand 0, single buffered']
    #allocation3 [shape = 's32[1]{0}', space=sflag, size = 0x4, scoped, tag = 'scoped memory for tpu_custom_call.1']
    #allocation4 [shape = 's32[1]{0}', space=sflag, size = 0x4, scoped, tag = 'scoped memory for tpu_custom_call.1']
    #allocation5 [shape = 'u8[262144]{0}', space=vmem, size = 0x40000, scoped, tag = 'input window, operand 1, single buffered']
    #allocation6 [shape = 's32[1]{0}', space=sflag, size = 0x4, scoped, tag = 'scoped memory for tpu_custom_call.1']
    #allocation7 [shape = 'u8[65536]{0}', space=vmem, size = 0x10000, scoped, tag = 'input window, operand 3, single buffered']
    #allocation8 [shape = 'u8[65536]{0}', space=vmem, size = 0x10000, scoped, tag = 'output window, operand 0, single buffered']
    %9 = vsyncpa [#allocation3], 0
    %10 = vsyncpa [#allocation6], 0
    %11 = vsyncpa [#allocation4], 0
    // Predicated region
    $region2: #{tpu_custom_call.1} parent=1 // pred_check
      _
    $region3: #{tpu_custom_call.1} parent=1 // pred_check_branch
      %13 = sbr.rel (0) target = $region5
    $region4: #{tpu_custom_call.1} parent=1 // pred_region
      %s15 = ssub.s32 4096, 4096
      %16 = vsyncadd [#allocation3], %s15
      %s17 = sshll.u32 [#allocation2], 4
      %s18 = int_to_ptr.vmem [resolvable:$true] %s17
      %23 = dma.hbm_to_vmem [thread:$0]  %s0, 4096, %s18, [#allocation3], 128, 128, 8
    $region5: #{tpu_custom_call.1} parent=1 // pred_fallthru
      _
    // Predicated region
    $region6: #{tpu_custom_call.1} parent=1 // pred_check
      _
    $region7: #{tpu_custom_call.1} parent=1 // pred_check_branch
      %25 = sbr.rel (0) target = $region9
    $region8: #{tpu_custom_call.1} parent=1 // pred_region
      %s27 = ssub.s32 8192, 8192
      %28 = vsyncadd [#allocation6], %s27
      %s29 = sshll.u32 [#allocation5], 4
      %s30 = int_to_ptr.vmem [resolvable:$true] %s29
      %35 = dma.hbm_to_vmem [thread:$0]  %s1, 8192, %s30, [#allocation6], 128, 128, 8
    $region9: #{tpu_custom_call.1} parent=1 // pred_fallthru
      _
    // Predicated region
    $region10: #{tpu_custom_call.1} parent=1 // pred_check
      _
    $region11: #{tpu_custom_call.1} parent=1 // pred_check_branch
      %37 = sbr.rel (0) target = $region13
    $region12: #{tpu_custom_call.1} parent=1 // pred_region
      _
    $region13: #{tpu_custom_call.1} parent=1 // pred_fallthru
      _
    // Predicated region
    $region14: #{tpu_custom_call.1} parent=1 // pred_check
      _
    $region15: #{tpu_custom_call.1} parent=1 // pred_check_branch
      %39 = sbr.rel (0) target = $region17
    $region16: #{tpu_custom_call.1} parent=1 // pred_region
      %s41 = ssub.s32 2048, 2048
      %42 = vsyncadd [#allocation6], %s41
      %s43 = sshll.u32 [#allocation7], 4
      %s44 = int_to_ptr.vmem [resolvable:$true] %s43
      %49 = dma.hbm_to_vmem [thread:$0]  %s3, 2048, %s44, [#allocation6], 128, 128, 8
    $region17: #{tpu_custom_call.1} parent=1 // pred_fallthru
      _
    // Predicated region
    $region18: #{tpu_custom_call.1} parent=1 // pred_check
      _
    $region19: #{tpu_custom_call.1} parent=1 // pred_check_branch
      %51 = sbr.rel (0) target = $region21
    $region20: #{tpu_custom_call.1} parent=1 // pred_region
      %52 = dma.done [#allocation3], 4096
    $region21: #{tpu_custom_call.1} parent=1 // pred_fallthru
      _
    // Predicated region
    $region22: #{tpu_custom_call.1} parent=1 // pred_check
      _
    $region23: #{tpu_custom_call.1} parent=1 // pred_check_branch
      %54 = sbr.rel (0) target = $region25
    $region24: #{tpu_custom_call.1} parent=1 // pred_region
      %55 = dma.done [#allocation6], 8192
    $region25: #{tpu_custom_call.1} parent=1 // pred_fallthru
      _
    // Predicated region
    $region26: #{tpu_custom_call.1} parent=1 // pred_check
      _
    $region27: #{tpu_custom_call.1} parent=1 // pred_check_branch
      %57 = sbr.rel (0) target = $region29
    $region28: #{tpu_custom_call.1} parent=1 // pred_region
      %58 = dma.done [#allocation6], 2048
    $region29: #{tpu_custom_call.1} parent=1 // pred_fallthru
      _
    %v59 = vld [vmem:[#allocation7] sm:$0xff]
    %v60 = vld [vmem:[#allocation7 + $0x8] sm:$0xff]
    %v61 = vld [vmem:[#allocation7 + $0x10] sm:$0xff]
    %v62 = vld [vmem:[#allocation7 + $0x18] sm:$0xff]
    %v63 = vld [vmem:[#allocation7 + $0x20] sm:$0xff]
    %v64 = vld [vmem:[#allocation7 + $0x28] sm:$0xff]
    %v65 = vld [vmem:[#allocation7 + $0x30] sm:$0xff]
    %v66 = vld [vmem:[#allocation7 + $0x38] sm:$0xff]
    %v67 = vld [vmem:[#allocation7 + $0x40] sm:$0xff]
    %v68 = vld [vmem:[#allocation7 + $0x48] sm:$0xff]
    %v69 = vld [vmem:[#allocation7 + $0x50] sm:$0xff]
    %v70 = vld [vmem:[#allocation7 + $0x58] sm:$0xff]
    %v71 = vld [vmem:[#allocation7 + $0x60] sm:$0xff]
    %v72 = vld [vmem:[#allocation7 + $0x68] sm:$0xff]
    %v73 = vld [vmem:[#allocation7 + $0x70] sm:$0xff]
    %v74 = vld [vmem:[#allocation7 + $0x78] sm:$0xff]
    %v75 = vld [vmem:[#allocation2] sm:$0xff]
    %v76 = vld [vmem:[#allocation2 + $0x8] sm:$0xff]
    %v77 = vld [vmem:[#allocation2 + $0x10] sm:$0xff]
    %v78 = vld [vmem:[#allocation2 + $0x18] sm:$0xff]
    %v79 = vld [vmem:[#allocation2 + $0x20] sm:$0xff]
    %v80 = vld [vmem:[#allocation2 + $0x28] sm:$0xff]
    %v81 = vld [vmem:[#allocation2 + $0x30] sm:$0xff]
    %v82 = vld [vmem:[#allocation2 + $0x38] sm:$0xff]
    %v83 = vld [vmem:[#allocation2 + $0x40] sm:$0xff]
    %v84 = vld [vmem:[#allocation2 + $0x48] sm:$0xff]
    %v85 = vld [vmem:[#allocation2 + $0x50] sm:$0xff]
    %v86 = vld [vmem:[#allocation2 + $0x58] sm:$0xff]
    %v87 = vld [vmem:[#allocation2 + $0x60] sm:$0xff]
    %v88 = vld [vmem:[#allocation2 + $0x68] sm:$0xff]
    %v89 = vld [vmem:[#allocation2 + $0x70] sm:$0xff]
    %v90 = vld [vmem:[#allocation2 + $0x78] sm:$0xff]
    %91 = vmatprep.subr.mxu0 0.0
    %92 = vmatpush1.msra.mxu0 %v74
    %93 = vmatprep.subr.mxu0 0.0
    %94 = vmatpush1.msra.mxu0 %v73
    %95 = vmatprep.subr.mxu0 0.0
    %96 = vmatpush1.msra.mxu0 %v72
    %97 = vmatprep.subr.mxu0 0.0
    %98 = vmatpush1.msra.mxu0 %v71
    %99 = vmatprep.subr.mxu0 0.0
    %100 = vmatpush1.msra.mxu0 %v70
    %101 = vmatprep.subr.mxu0 0.0
    %102 = vmatpush1.msra.mxu0 %v69
    %103 = vmatprep.subr.mxu0 0.0
    %104 = vmatpush1.msra.mxu0 %v68
    %105 = vmatprep.subr.mxu0 0.0
    %106 = vmatpush1.msra.mxu0 %v67
    %107 = vmatprep.subr.mxu0 0.0
    %108 = vmatpush1.msra.mxu0 %v66
    %109 = vmatprep.subr.mxu0 0.0
    %110 = vmatpush1.msra.mxu0 %v65
    %111 = vmatprep.subr.mxu0 0.0
    %112 = vmatpush1.msra.mxu0 %v64
    %113 = vmatprep.subr.mxu0 0.0
    %114 = vmatpush1.msra.mxu0 %v63
    %115 = vmatprep.subr.mxu0 0.0
    %116 = vmatpush1.msra.mxu0 %v62
    %117 = vmatprep.subr.mxu0 0.0
    %118 = vmatpush1.msra.mxu0 %v61
    %119 = vmatprep.subr.mxu0 0.0
    %120 = vmatpush1.msra.mxu0 %v60
    %121 = vmatprep.subr.mxu0 0.0
    %122 = vmatpush1.msra.mxu0 %v59
    %123 = vmatprep.subr.mxu0 0.0
    %124 = vmatpush2.msra.mxu0 0.0
    %125 = vmatprep.subr.mxu0 0.0
    %126 = vmatpush2.msra.mxu0 0.0
    %127 = vmatprep.subr.mxu0 0.0
    %128 = vmatpush2.msra.mxu0 0.0
    %129 = vmatprep.subr.mxu0 0.0
    %130 = vmatpush2.msra.mxu0 0.0
    %131 = vmatprep.subr.mxu0 0.0
    %132 = vmatpush2.msra.mxu0 0.0
    %133 = vmatprep.subr.mxu0 0.0
    %134 = vmatpush2.msra.mxu0 0.0
    %135 = vmatprep.subr.mxu0 0.0
    %136 = vmatpush2.msra.mxu0 0.0
    %137 = vmatprep.subr.mxu0 0.0
    %138 = vmatpush2.msra.mxu0 0.0
    %139 = vmatprep.subr.mxu0 0.0
    %140 = vmatpush2.msra.mxu0 0.0
    %141 = vmatprep.subr.mxu0 0.0
    %142 = vmatpush2.msra.mxu0 0.0
    %143 = vmatprep.subr.mxu0 0.0
    %144 = vmatpush2.msra.mxu0 0.0
    %145 = vmatprep.subr.mxu0 0.0
    %146 = vmatpush2.msra.mxu0 0.0
    %147 = vmatprep.subr.mxu0 0.0
    %148 = vmatpush2.msra.mxu0 0.0
    %149 = vmatprep.subr.mxu0 0.0
    %150 = vmatpush2.msra.mxu0 0.0
    %151 = vmatprep.subr.mxu0 0.0
    %152 = vmatpush2.msra.mxu0 0.0
    %153 = vmatprep.subr.mxu0 0.0
    %154 = vmatpush2.msra.mxu0 0.0
    %155 = vmatprep.mubr.f32.mxu0 0.0
    %156 = vmatmul.mubr.f32.gmra.mxu0 %v75
    %v157 = vpop.f32.mrf.mxu0
    %v158 = vadd.f32 0.0, %v157
    %v159 = vpop.f32.mrf.mxu0
    %160 = vmatprep.mubr.f32.mxu0 0.0
    %161 = vmatmul.mubr.f32.gmra.mxu0 %v76
    %v162 = vpop.f32.mrf.mxu0
    %v163 = vadd.f32 0.0, %v162
    %v164 = vpop.f32.mrf.mxu0
    %165 = vmatprep.mubr.f32.mxu0 0.0
    %166 = vmatmul.mubr.f32.gmra.mxu0 %v77
    %v167 = vpop.f32.mrf.mxu0
    %v168 = vadd.f32 0.0, %v167
    %v169 = vpop.f32.mrf.mxu0
    %170 = vmatprep.mubr.f32.mxu0 0.0
    %171 = vmatmul.mubr.f32.gmra.mxu0 %v78
    %v172 = vpop.f32.mrf.mxu0
    %v173 = vadd.f32 0.0, %v172
    %v174 = vpop.f32.mrf.mxu0
    %175 = vmatprep.mubr.f32.mxu0 0.0
    %176 = vmatmul.mubr.f32.gmra.mxu0 %v79
    %v177 = vpop.f32.mrf.mxu0
    %v178 = vadd.f32 0.0, %v177
    %v179 = vpop.f32.mrf.mxu0
    %180 = vmatprep.mubr.f32.mxu0 0.0
    %181 = vmatmul.mubr.f32.gmra.mxu0 %v80
    %v182 = vpop.f32.mrf.mxu0
    %v183 = vadd.f32 0.0, %v182
    %v184 = vpop.f32.mrf.mxu0
    %185 = vmatprep.mubr.f32.mxu0 0.0
    %186 = vmatmul.mubr.f32.gmra.mxu0 %v81
    %v187 = vpop.f32.mrf.mxu0
    %v188 = vadd.f32 0.0, %v187
    %v189 = vpop.f32.mrf.mxu0
    %190 = vmatprep.mubr.f32.mxu0 0.0
    %191 = vmatmul.mubr.f32.gmra.mxu0 %v82
    %v192 = vpop.f32.mrf.mxu0
    %v193 = vadd.f32 0.0, %v192
    %v194 = vpop.f32.mrf.mxu0
    %195 = vmatprep.mubr.f32.mxu0 0.0
    %196 = vmatmul.mubr.f32.gmra.mxu0 %v83
    %v197 = vpop.f32.mrf.mxu0
    %v198 = vadd.f32 0.0, %v197
    %v199 = vpop.f32.mrf.mxu0
    %200 = vmatprep.mubr.f32.mxu0 0.0
    %201 = vmatmul.mubr.f32.gmra.mxu0 %v84
    %v202 = vpop.f32.mrf.mxu0
    %v203 = vadd.f32 0.0, %v202
    %v204 = vpop.f32.mrf.mxu0
    %205 = vmatprep.mubr.f32.mxu0 0.0
    %206 = vmatmul.mubr.f32.gmra.mxu0 %v85
    %v207 = vpop.f32.mrf.mxu0
    %v208 = vadd.f32 0.0, %v207
    %v209 = vpop.f32.mrf.mxu0
    %210 = vmatprep.mubr.f32.mxu0 0.0
    %211 = vmatmul.mubr.f32.gmra.mxu0 %v86
    %v212 = vpop.f32.mrf.mxu0
    %v213 = vadd.f32 0.0, %v212
    %v214 = vpop.f32.mrf.mxu0
    %215 = vmatprep.mubr.f32.mxu0 0.0
    %216 = vmatmul.mubr.f32.gmra.mxu0 %v87
    %v217 = vpop.f32.mrf.mxu0
    %v218 = vadd.f32 0.0, %v217
    %v219 = vpop.f32.mrf.mxu0
    %220 = vmatprep.mubr.f32.mxu0 0.0
    %221 = vmatmul.mubr.f32.gmra.mxu0 %v88
    %v222 = vpop.f32.mrf.mxu0
    %v223 = vadd.f32 0.0, %v222
    %v224 = vpop.f32.mrf.mxu0
    %225 = vmatprep.mubr.f32.mxu0 0.0
    %226 = vmatmul.mubr.f32.gmra.mxu0 %v89
    %v227 = vpop.f32.mrf.mxu0
    %v228 = vadd.f32 0.0, %v227
    %v229 = vpop.f32.mrf.mxu0
    %230 = vmatprep.mubr.f32.mxu0 0.0
    %231 = vmatmul.mubr.f32.gmra.mxu0 %v90
    %v232 = vpop.f32.mrf.mxu0
    %v233 = vadd.f32 0.0, %v232
    %v234 = vpop.f32.mrf.mxu0
    %235 = vdwg.mxu0
    %v236 = vld [vmem:[#allocation5] sm:$0xff]
    %v237 = vld [vmem:[#allocation5 + $0x8] sm:$0xff]
    %v238 = vld [vmem:[#allocation5 + $0x10] sm:$0xff]
    %v239 = vld [vmem:[#allocation5 + $0x18] sm:$0xff]
    %v240 = vld [vmem:[#allocation5 + $0x20] sm:$0xff]
    %v241 = vld [vmem:[#allocation5 + $0x28] sm:$0xff]
    %v242 = vld [vmem:[#allocation5 + $0x30] sm:$0xff]
    %v243 = vld [vmem:[#allocation5 + $0x38] sm:$0xff]
    %v244 = vld [vmem:[#allocation5 + $0x40] sm:$0xff]
    %v245 = vld [vmem:[#allocation5 + $0x48] sm:$0xff]
    %v246 = vld [vmem:[#allocation5 + $0x50] sm:$0xff]
    %v247 = vld [vmem:[#allocation5 + $0x58] sm:$0xff]
    %v248 = vld [vmem:[#allocation5 + $0x60] sm:$0xff]
    %v249 = vld [vmem:[#allocation5 + $0x68] sm:$0xff]
    %v250 = vld [vmem:[#allocation5 + $0x70] sm:$0xff]
    %v251 = vld [vmem:[#allocation5 + $0x78] sm:$0xff]
    %v252 = vld [vmem:[#allocation5 + $0x80] sm:$0xff]
    %v253 = vld [vmem:[#allocation5 + $0x88] sm:$0xff]
    %v254 = vld [vmem:[#allocation5 + $0x90] sm:$0xff]
    %v255 = vld [vmem:[#allocation5 + $0x98] sm:$0xff]
    %v256 = vld [vmem:[#allocation5 + $0xa0] sm:$0xff]
    %v257 = vld [vmem:[#allocation5 + $0xa8] sm:$0xff]
    %v258 = vld [vmem:[#allocation5 + $0xb0] sm:$0xff]
    %v259 = vld [vmem:[#allocation5 + $0xb8] sm:$0xff]
    %v260 = vld [vmem:[#allocation5 + $0xc0] sm:$0xff]
    %v261 = vld [vmem:[#allocation5 + $0xc8] sm:$0xff]
    %v262 = vld [vmem:[#allocation5 + $0xd0] sm:$0xff]
    %v263 = vld [vmem:[#allocation5 + $0xd8] sm:$0xff]
    %v264 = vld [vmem:[#allocation5 + $0xe0] sm:$0xff]
    %v265 = vld [vmem:[#allocation5 + $0xe8] sm:$0xff]
    %v266 = vld [vmem:[#allocation5 + $0xf0] sm:$0xff]
    %v267 = vld [vmem:[#allocation5 + $0xf8] sm:$0xff]
    %v268 = vld [vmem:[%s2] sm:$0x1]
    %v269 = vlaneseq
    %v270 = vshrl.u32 %v269, 7
    %v271 = vsub.s32 0, %v270
    %v272 = vrot.slane %v268, %v271
    %273 = vmatprep.subr.mxu0 0.0
    %274 = vmatpush1.msra.mxu0 %v251
    %275 = vmatprep.subr.mxu0 0.0
    %276 = vmatpush1.msra.mxu0 %v250
    %277 = vmatprep.subr.mxu0 0.0
    %278 = vmatpush1.msra.mxu0 %v249
    %279 = vmatprep.subr.mxu0 0.0
    %280 = vmatpush1.msra.mxu0 %v248
    %281 = vmatprep.subr.mxu0 0.0
    %282 = vmatpush1.msra.mxu0 %v247
    %283 = vmatprep.subr.mxu0 0.0
    %284 = vmatpush1.msra.mxu0 %v246
    %285 = vmatprep.subr.mxu0 0.0
    %286 = vmatpush1.msra.mxu0 %v245
    %287 = vmatprep.subr.mxu0 0.0
    %288 = vmatpush1.msra.mxu0 %v244
    %289 = vmatprep.subr.mxu0 0.0
    %290 = vmatpush1.msra.mxu0 %v243
    %291 = vmatprep.subr.mxu0 0.0
    %292 = vmatpush1.msra.mxu0 %v242
    %293 = vmatprep.subr.mxu0 0.0
    %294 = vmatpush1.msra.mxu0 %v241
    %295 = vmatprep.subr.mxu0 0.0
    %296 = vmatpush1.msra.mxu0 %v240
    %297 = vmatprep.subr.mxu0 0.0
    %298 = vmatpush1.msra.mxu0 %v239
    %299 = vmatprep.subr.mxu0 0.0
    %300 = vmatpush1.msra.mxu0 %v238
    %301 = vmatprep.subr.mxu0 0.0
    %302 = vmatpush1.msra.mxu0 %v237
    %303 = vmatprep.subr.mxu0 0.0
    %304 = vmatpush1.msra.mxu0 %v236
    %305 = vmatprep.subr.mxu0 0.0
    %306 = vmatpush2.msra.mxu0 %v267
    %307 = vmatprep.subr.mxu0 0.0
    %308 = vmatpush2.msra.mxu0 %v266
    %309 = vmatprep.subr.mxu0 0.0
    %310 = vmatpush2.msra.mxu0 %v265
    %311 = vmatprep.subr.mxu0 0.0
    %312 = vmatpush2.msra.mxu0 %v264
    %313 = vmatprep.subr.mxu0 0.0
    %314 = vmatpush2.msra.mxu0 %v263
    %315 = vmatprep.subr.mxu0 0.0
    %316 = vmatpush2.msra.mxu0 %v262
    %317 = vmatprep.subr.mxu0 0.0
    %318 = vmatpush2.msra.mxu0 %v261
    %319 = vmatprep.subr.mxu0 0.0
    %320 = vmatpush2.msra.mxu0 %v260
    %321 = vmatprep.subr.mxu0 0.0
    %322 = vmatpush2.msra.mxu0 %v259
    %323 = vmatprep.subr.mxu0 0.0
    %324 = vmatpush2.msra.mxu0 %v258
    %325 = vmatprep.subr.mxu0 0.0
    %326 = vmatpush2.msra.mxu0 %v257
    %327 = vmatprep.subr.mxu0 0.0
    %328 = vmatpush2.msra.mxu0 %v256
    %329 = vmatprep.subr.mxu0 0.0
    %330 = vmatpush2.msra.mxu0 %v255
    %331 = vmatprep.subr.mxu0 0.0
    %332 = vmatpush2.msra.mxu0 %v254
    %333 = vmatprep.subr.mxu0 0.0
    %334 = vmatpush2.msra.mxu0 %v253
    %335 = vmatprep.subr.mxu0 0.0
    %336 = vmatpush2.msra.mxu0 %v252
    %337 = vmatprep.mubr.f32.mxu0 %v158
    %338 = vmatmul.mubr.f32.gmra.mxu0 %v59
    %v339 = vpop.f32.mrf.mxu0
    %v340 = vadd.f32 %v272, %v339
    %v341 = vpop.f32.mrf.mxu0
    %342 = vmatprep.mubr.f32.mxu0 %v163
    %343 = vmatmul.mubr.f32.gmra.mxu0 %v60
    %v344 = vpop.f32.mrf.mxu0
    %v345 = vadd.f32 %v272, %v344
    %v346 = vpop.f32.mrf.mxu0
    %347 = vmatprep.mubr.f32.mxu0 %v168
    %348 = vmatmul.mubr.f32.gmra.mxu0 %v61
    %v349 = vpop.f32.mrf.mxu0
    %v350 = vadd.f32 %v272, %v349
    %v351 = vpop.f32.mrf.mxu0
    %352 = vmatprep.mubr.f32.mxu0 %v173
    %353 = vmatmul.mubr.f32.gmra.mxu0 %v62
    %v354 = vpop.f32.mrf.mxu0
    %v355 = vadd.f32 %v272, %v354
    %v356 = vpop.f32.mrf.mxu0
    %357 = vmatprep.mubr.f32.mxu0 %v178
    %358 = vmatmul.mubr.f32.gmra.mxu0 %v63
    %v359 = vpop.f32.mrf.mxu0
    %v360 = vadd.f32 %v272, %v359
    %v361 = vpop.f32.mrf.mxu0
    %362 = vmatprep.mubr.f32.mxu0 %v183
    %363 = vmatmul.mubr.f32.gmra.mxu0 %v64
    %v364 = vpop.f32.mrf.mxu0
    %v365 = vadd.f32 %v272, %v364
    %v366 = vpop.f32.mrf.mxu0
    %367 = vmatprep.mubr.f32.mxu0 %v188
    %368 = vmatmul.mubr.f32.gmra.mxu0 %v65
    %v369 = vpop.f32.mrf.mxu0
    %v370 = vadd.f32 %v272, %v369
    %v371 = vpop.f32.mrf.mxu0
    %372 = vmatprep.mubr.f32.mxu0 %v193
    %373 = vmatmul.mubr.f32.gmra.mxu0 %v66
    %v374 = vpop.f32.mrf.mxu0
    %v375 = vadd.f32 %v272, %v374
    %v376 = vpop.f32.mrf.mxu0
    %377 = vmatprep.mubr.f32.mxu0 %v198
    %378 = vmatmul.mubr.f32.gmra.mxu0 %v67
    %v379 = vpop.f32.mrf.mxu0
    %v380 = vadd.f32 %v272, %v379
    %v381 = vpop.f32.mrf.mxu0
    %382 = vmatprep.mubr.f32.mxu0 %v203
    %383 = vmatmul.mubr.f32.gmra.mxu0 %v68
    %v384 = vpop.f32.mrf.mxu0
    %v385 = vadd.f32 %v272, %v384
    %v386 = vpop.f32.mrf.mxu0
    %387 = vmatprep.mubr.f32.mxu0 %v208
    %388 = vmatmul.mubr.f32.gmra.mxu0 %v69
    %v389 = vpop.f32.mrf.mxu0
    %v390 = vadd.f32 %v272, %v389
    %v391 = vpop.f32.mrf.mxu0
    %392 = vmatprep.mubr.f32.mxu0 %v213
    %393 = vmatmul.mubr.f32.gmra.mxu0 %v70
    %v394 = vpop.f32.mrf.mxu0
    %v395 = vadd.f32 %v272, %v394
    %v396 = vpop.f32.mrf.mxu0
    %397 = vmatprep.mubr.f32.mxu0 %v218
    %398 = vmatmul.mubr.f32.gmra.mxu0 %v71
    %v399 = vpop.f32.mrf.mxu0
    %v400 = vadd.f32 %v272, %v399
    %v401 = vpop.f32.mrf.mxu0
    %402 = vmatprep.mubr.f32.mxu0 %v223
    %403 = vmatmul.mubr.f32.gmra.mxu0 %v72
    %v404 = vpop.f32.mrf.mxu0
    %v405 = vadd.f32 %v272, %v404
    %v406 = vpop.f32.mrf.mxu0
    %407 = vmatprep.mubr.f32.mxu0 %v228
    %408 = vmatmul.mubr.f32.gmra.mxu0 %v73
    %v409 = vpop.f32.mrf.mxu0
    %v410 = vadd.f32 %v272, %v409
    %v411 = vpop.f32.mrf.mxu0
    %412 = vmatprep.mubr.f32.mxu0 %v233
    %413 = vmatmul.mubr.f32.gmra.mxu0 %v74
    %v414 = vpop.f32.mrf.mxu0
    %v415 = vadd.f32 %v272, %v414
    %v416 = vpop.f32.mrf.mxu0
    %417 = vdwg.mxu0
    %v418 = vmax.f32 %v340, 0.0
    %v419 = vmax.f32 %v345, 0.0
    %v420 = vmax.f32 %v350, 0.0
    %v421 = vmax.f32 %v355, 0.0
    %v422 = vmax.f32 %v360, 0.0
    %v423 = vmax.f32 %v365, 0.0
    %v424 = vmax.f32 %v370, 0.0
    %v425 = vmax.f32 %v375, 0.0
    %v426 = vmax.f32 %v380, 0.0
    %v427 = vmax.f32 %v385, 0.0
    %v428 = vmax.f32 %v390, 0.0
    %v429 = vmax.f32 %v395, 0.0
    %v430 = vmax.f32 %v400, 0.0
    %v431 = vmax.f32 %v405, 0.0
    %v432 = vmax.f32 %v410, 0.0
    %v433 = vmax.f32 %v415, 0.0
    %s434 = scalar_lea.vmem [#allocation2], 128
    %v435 = vld [vmem:[%s434] sm:$0xff]
    %v436 = vld [vmem:[%s434 + $0x8] sm:$0xff]
    %v437 = vld [vmem:[%s434 + $0x10] sm:$0xff]
    %v438 = vld [vmem:[%s434 + $0x18] sm:$0xff]
    %v439 = vld [vmem:[%s434 + $0x20] sm:$0xff]
    %v440 = vld [vmem:[%s434 + $0x28] sm:$0xff]
    %v441 = vld [vmem:[%s434 + $0x30] sm:$0xff]
    %v442 = vld [vmem:[%s434 + $0x38] sm:$0xff]
    %v443 = vld [vmem:[%s434 + $0x40] sm:$0xff]
    %v444 = vld [vmem:[%s434 + $0x48] sm:$0xff]
    %v445 = vld [vmem:[%s434 + $0x50] sm:$0xff]
    %v446 = vld [vmem:[%s434 + $0x58] sm:$0xff]
    %v447 = vld [vmem:[%s434 + $0x60] sm:$0xff]
    %v448 = vld [vmem:[%s434 + $0x68] sm:$0xff]
    %v449 = vld [vmem:[%s434 + $0x70] sm:$0xff]
    %v450 = vld [vmem:[%s434 + $0x78] sm:$0xff]
    %451 = vmatprep.subr.mxu0 0.0
    %452 = vmatpush1.msra.mxu0 %v433
    %453 = vmatprep.subr.mxu0 0.0
    %454 = vmatpush1.msra.mxu0 %v432
    %455 = vmatprep.subr.mxu0 0.0
    %456 = vmatpush1.msra.mxu0 %v431
    %457 = vmatprep.subr.mxu0 0.0
    %458 = vmatpush1.msra.mxu0 %v430
    %459 = vmatprep.subr.mxu0 0.0
    %460 = vmatpush1.msra.mxu0 %v429
    %461 = vmatprep.subr.mxu0 0.0
    %462 = vmatpush1.msra.mxu0 %v428
    %463 = vmatprep.subr.mxu0 0.0
    %464 = vmatpush1.msra.mxu0 %v427
    %465 = vmatprep.subr.mxu0 0.0
    %466 = vmatpush1.msra.mxu0 %v426
    %467 = vmatprep.subr.mxu0 0.0
    %468 = vmatpush1.msra.mxu0 %v425
    %469 = vmatprep.subr.mxu0 0.0
    %470 = vmatpush1.msra.mxu0 %v424
    %471 = vmatprep.subr.mxu0 0.0
    %472 = vmatpush1.msra.mxu0 %v423
    %473 = vmatprep.subr.mxu0 0.0
    %474 = vmatpush1.msra.mxu0 %v422
    %475 = vmatprep.subr.mxu0 0.0
    %476 = vmatpush1.msra.mxu0 %v421
    %477 = vmatprep.subr.mxu0 0.0
    %478 = vmatpush1.msra.mxu0 %v420
    %479 = vmatprep.subr.mxu0 0.0
    %480 = vmatpush1.msra.mxu0 %v419
    %481 = vmatprep.subr.mxu0 0.0
    %482 = vmatpush1.msra.mxu0 %v418
    %483 = vmatprep.subr.mxu0 0.0
    %484 = vmatpush2.msra.mxu0 0.0
    %485 = vmatprep.subr.mxu0 0.0
    %486 = vmatpush2.msra.mxu0 0.0
    %487 = vmatprep.subr.mxu0 0.0
    %488 = vmatpush2.msra.mxu0 0.0
    %489 = vmatprep.subr.mxu0 0.0
    %490 = vmatpush2.msra.mxu0 0.0
    %491 = vmatprep.subr.mxu0 0.0
    %492 = vmatpush2.msra.mxu0 0.0
    %493 = vmatprep.subr.mxu0 0.0
    %494 = vmatpush2.msra.mxu0 0.0
    %495 = vmatprep.subr.mxu0 0.0
    %496 = vmatpush2.msra.mxu0 0.0
    %497 = vmatprep.subr.mxu0 0.0
    %498 = vmatpush2.msra.mxu0 0.0
    %499 = vmatprep.subr.mxu0 0.0
    %500 = vmatpush2.msra.mxu0 0.0
    %501 = vmatprep.subr.mxu0 0.0
    %502 = vmatpush2.msra.mxu0 0.0
    %503 = vmatprep.subr.mxu0 0.0
    %504 = vmatpush2.msra.mxu0 0.0
    %505 = vmatprep.subr.mxu0 0.0
    %506 = vmatpush2.msra.mxu0 0.0
    %507 = vmatprep.subr.mxu0 0.0
    %508 = vmatpush2.msra.mxu0 0.0
    %509 = vmatprep.subr.mxu0 0.0
    %510 = vmatpush2.msra.mxu0 0.0
    %511 = vmatprep.subr.mxu0 0.0
    %512 = vmatpush2.msra.mxu0 0.0
    %513 = vmatprep.subr.mxu0 0.0
    %514 = vmatpush2.msra.mxu0 0.0
    %515 = vmatprep.mubr.f32.mxu0 0.0
    %516 = vmatmul.mubr.f32.gmra.mxu0 %v435
    %v517 = vpop.f32.mrf.mxu0
    %v518 = vadd.f32 0.0, %v517
    %v519 = vpop.f32.mrf.mxu0
    %520 = vmatprep.mubr.f32.mxu0 0.0
    %521 = vmatmul.mubr.f32.gmra.mxu0 %v436
    %v522 = vpop.f32.mrf.mxu0
    %v523 = vadd.f32 0.0, %v522
    %v524 = vpop.f32.mrf.mxu0
    %525 = vmatprep.mubr.f32.mxu0 0.0
    %526 = vmatmul.mubr.f32.gmra.mxu0 %v437
    %v527 = vpop.f32.mrf.mxu0
    %v528 = vadd.f32 0.0, %v527
    %v529 = vpop.f32.mrf.mxu0
    %530 = vmatprep.mubr.f32.mxu0 0.0
    %531 = vmatmul.mubr.f32.gmra.mxu0 %v438
    %v532 = vpop.f32.mrf.mxu0
    %v533 = vadd.f32 0.0, %v532
    %v534 = vpop.f32.mrf.mxu0
    %535 = vmatprep.mubr.f32.mxu0 0.0
    %536 = vmatmul.mubr.f32.gmra.mxu0 %v439
    %v537 = vpop.f32.mrf.mxu0
    %v538 = vadd.f32 0.0, %v537
    %v539 = vpop.f32.mrf.mxu0
    %540 = vmatprep.mubr.f32.mxu0 0.0
    %541 = vmatmul.mubr.f32.gmra.mxu0 %v440
    %v542 = vpop.f32.mrf.mxu0
    %v543 = vadd.f32 0.0, %v542
    %v544 = vpop.f32.mrf.mxu0
    %545 = vmatprep.mubr.f32.mxu0 0.0
    %546 = vmatmul.mubr.f32.gmra.mxu0 %v441
    %v547 = vpop.f32.mrf.mxu0
    %v548 = vadd.f32 0.0, %v547
    %v549 = vpop.f32.mrf.mxu0
    %550 = vmatprep.mubr.f32.mxu0 0.0
    %551 = vmatmul.mubr.f32.gmra.mxu0 %v442
    %v552 = vpop.f32.mrf.mxu0
    %v553 = vadd.f32 0.0, %v552
    %v554 = vpop.f32.mrf.mxu0
    %555 = vmatprep.mubr.f32.mxu0 0.0
    %556 = vmatmul.mubr.f32.gmra.mxu0 %v443
    %v557 = vpop.f32.mrf.mxu0
    %v558 = vadd.f32 0.0, %v557
    %v559 = vpop.f32.mrf.mxu0
    %560 = vmatprep.mubr.f32.mxu0 0.0
    %561 = vmatmul.mubr.f32.gmra.mxu0 %v444
    %v562 = vpop.f32.mrf.mxu0
    %v563 = vadd.f32 0.0, %v562
    %v564 = vpop.f32.mrf.mxu0
    %565 = vmatprep.mubr.f32.mxu0 0.0
    %566 = vmatmul.mubr.f32.gmra.mxu0 %v445
    %v567 = vpop.f32.mrf.mxu0
    %v568 = vadd.f32 0.0, %v567
    %v569 = vpop.f32.mrf.mxu0
    %570 = vmatprep.mubr.f32.mxu0 0.0
    %571 = vmatmul.mubr.f32.gmra.mxu0 %v446
    %v572 = vpop.f32.mrf.mxu0
    %v573 = vadd.f32 0.0, %v572
    %v574 = vpop.f32.mrf.mxu0
    %575 = vmatprep.mubr.f32.mxu0 0.0
    %576 = vmatmul.mubr.f32.gmra.mxu0 %v447
    %v577 = vpop.f32.mrf.mxu0
    %v578 = vadd.f32 0.0, %v577
    %v579 = vpop.f32.mrf.mxu0
    %580 = vmatprep.mubr.f32.mxu0 0.0
    %581 = vmatmul.mubr.f32.gmra.mxu0 %v448
    %v582 = vpop.f32.mrf.mxu0
    %v583 = vadd.f32 0.0, %v582
    %v584 = vpop.f32.mrf.mxu0
    %585 = vmatprep.mubr.f32.mxu0 0.0
    %586 = vmatmul.mubr.f32.gmra.mxu0 %v449
    %v587 = vpop.f32.mrf.mxu0
    %v588 = vadd.f32 0.0, %v587
    %v589 = vpop.f32.mrf.mxu0
    %590 = vmatprep.mubr.f32.mxu0 0.0
    %591 = vmatmul.mubr.f32.gmra.mxu0 %v450
    %v592 = vpop.f32.mrf.mxu0
    %v593 = vadd.f32 0.0, %v592
    %v594 = vpop.f32.mrf.mxu0
    %595 = vdwg.mxu0
    %s596 = scalar_lea.vmem [#allocation5], 256
    %v597 = vld [vmem:[%s596] sm:$0xff]
    %v598 = vld [vmem:[%s596 + $0x8] sm:$0xff]
    %v599 = vld [vmem:[%s596 + $0x10] sm:$0xff]
    %v600 = vld [vmem:[%s596 + $0x18] sm:$0xff]
    %v601 = vld [vmem:[%s596 + $0x20] sm:$0xff]
    %v602 = vld [vmem:[%s596 + $0x28] sm:$0xff]
    %v603 = vld [vmem:[%s596 + $0x30] sm:$0xff]
    %v604 = vld [vmem:[%s596 + $0x38] sm:$0xff]
    %v605 = vld [vmem:[%s596 + $0x40] sm:$0xff]
    %v606 = vld [vmem:[%s596 + $0x48] sm:$0xff]
    %v607 = vld [vmem:[%s596 + $0x50] sm:$0xff]
    %v608 = vld [vmem:[%s596 + $0x58] sm:$0xff]
    %v609 = vld [vmem:[%s596 + $0x60] sm:$0xff]
    %v610 = vld [vmem:[%s596 + $0x68] sm:$0xff]
    %v611 = vld [vmem:[%s596 + $0x70] sm:$0xff]
    %v612 = vld [vmem:[%s596 + $0x78] sm:$0xff]
    %v613 = vld [vmem:[%s596 + $0x80] sm:$0xff]
    %v614 = vld [vmem:[%s596 + $0x88] sm:$0xff]
    %v615 = vld [vmem:[%s596 + $0x90] sm:$0xff]
    %v616 = vld [vmem:[%s596 + $0x98] sm:$0xff]
    %v617 = vld [vmem:[%s596 + $0xa0] sm:$0xff]
    %v618 = vld [vmem:[%s596 + $0xa8] sm:$0xff]
    %v619 = vld [vmem:[%s596 + $0xb0] sm:$0xff]
    %v620 = vld [vmem:[%s596 + $0xb8] sm:$0xff]
    %v621 = vld [vmem:[%s596 + $0xc0] sm:$0xff]
    %v622 = vld [vmem:[%s596 + $0xc8] sm:$0xff]
    %v623 = vld [vmem:[%s596 + $0xd0] sm:$0xff]
    %v624 = vld [vmem:[%s596 + $0xd8] sm:$0xff]
    %v625 = vld [vmem:[%s596 + $0xe0] sm:$0xff]
    %v626 = vld [vmem:[%s596 + $0xe8] sm:$0xff]
    %v627 = vld [vmem:[%s596 + $0xf0] sm:$0xff]
    %v628 = vld [vmem:[%s596 + $0xf8] sm:$0xff]
    %v629 = vld [vmem:[%s2 + $0x1] sm:$0x1]
    %v630 = vlaneseq
    %v631 = vshrl.u32 %v630, 7
    %v632 = vsub.s32 0, %v631
    %v633 = vrot.slane %v629, %v632
    %634 = vmatprep.subr.mxu0 0.0
    %635 = vmatpush1.msra.mxu0 %v612
    %636 = vmatprep.subr.mxu0 0.0
    %637 = vmatpush1.msra.mxu0 %v611
    %638 = vmatprep.subr.mxu0 0.0
    %639 = vmatpush1.msra.mxu0 %v610
    %640 = vmatprep.subr.mxu0 0.0
    %641 = vmatpush1.msra.mxu0 %v609
    %642 = vmatprep.subr.mxu0 0.0
    %643 = vmatpush1.msra.mxu0 %v608
    %644 = vmatprep.subr.mxu0 0.0
    %645 = vmatpush1.msra.mxu0 %v607
    %646 = vmatprep.subr.mxu0 0.0
    %647 = vmatpush1.msra.mxu0 %v606
    %648 = vmatprep.subr.mxu0 0.0
    %649 = vmatpush1.msra.mxu0 %v605
    %650 = vmatprep.subr.mxu0 0.0
    %651 = vmatpush1.msra.mxu0 %v604
    %652 = vmatprep.subr.mxu0 0.0
    %653 = vmatpush1.msra.mxu0 %v603
    %654 = vmatprep.subr.mxu0 0.0
    %655 = vmatpush1.msra.mxu0 %v602
    %656 = vmatprep.subr.mxu0 0.0
    %657 = vmatpush1.msra.mxu0 %v601
    %658 = vmatprep.subr.mxu0 0.0
    %659 = vmatpush1.msra.mxu0 %v600
    %660 = vmatprep.subr.mxu0 0.0
    %661 = vmatpush1.msra.mxu0 %v599
    %662 = vmatprep.subr.mxu0 0.0
    %663 = vmatpush1.msra.mxu0 %v598
    %664 = vmatprep.subr.mxu0 0.0
    %665 = vmatpush1.msra.mxu0 %v597
    %666 = vmatprep.subr.mxu0 0.0
    %667 = vmatpush2.msra.mxu0 %v628
    %668 = vmatprep.subr.mxu0 0.0
    %669 = vmatpush2.msra.mxu0 %v627
    %670 = vmatprep.subr.mxu0 0.0
    %671 = vmatpush2.msra.mxu0 %v626
    %672 = vmatprep.subr.mxu0 0.0
    %673 = vmatpush2.msra.mxu0 %v625
    %674 = vmatprep.subr.mxu0 0.0
    %675 = vmatpush2.msra.mxu0 %v624
    %676 = vmatprep.subr.mxu0 0.0
    %677 = vmatpush2.msra.mxu0 %v623
    %678 = vmatprep.subr.mxu0 0.0
    %679 = vmatpush2.msra.mxu0 %v622
    %680 = vmatprep.subr.mxu0 0.0
    %681 = vmatpush2.msra.mxu0 %v621
    %682 = vmatprep.subr.mxu0 0.0
    %683 = vmatpush2.msra.mxu0 %v620
    %684 = vmatprep.subr.mxu0 0.0
    %685 = vmatpush2.msra.mxu0 %v619
    %686 = vmatprep.subr.mxu0 0.0
    %687 = vmatpush2.msra.mxu0 %v618
    %688 = vmatprep.subr.mxu0 0.0
    %689 = vmatpush2.msra.mxu0 %v617
    %690 = vmatprep.subr.mxu0 0.0
    %691 = vmatpush2.msra.mxu0 %v616
    %692 = vmatprep.subr.mxu0 0.0
    %693 = vmatpush2.msra.mxu0 %v615
    %694 = vmatprep.subr.mxu0 0.0
    %695 = vmatpush2.msra.mxu0 %v614
    %696 = vmatprep.subr.mxu0 0.0
    %697 = vmatpush2.msra.mxu0 %v613
    %698 = vmatprep.mubr.f32.mxu0 %v518
    %699 = vmatmul.mubr.f32.gmra.mxu0 %v418
    %v700 = vpop.f32.mrf.mxu0
    %v701 = vadd.f32 %v633, %v700
    %v702 = vpop.f32.mrf.mxu0
    %703 = vmatprep.mubr.f32.mxu0 %v523
    %704 = vmatmul.mubr.f32.gmra.mxu0 %v419
    %v705 = vpop.f32.mrf.mxu0
    %v706 = vadd.f32 %v633, %v705
    %v707 = vpop.f32.mrf.mxu0
    %708 = vmatprep.mubr.f32.mxu0 %v528
    %709 = vmatmul.mubr.f32.gmra.mxu0 %v420
    %v710 = vpop.f32.mrf.mxu0
    %v711 = vadd.f32 %v633, %v710
    %v712 = vpop.f32.mrf.mxu0
    %713 = vmatprep.mubr.f32.mxu0 %v533
    %714 = vmatmul.mubr.f32.gmra.mxu0 %v421
    %v715 = vpop.f32.mrf.mxu0
    %v716 = vadd.f32 %v633, %v715
    %v717 = vpop.f32.mrf.mxu0
    %718 = vmatprep.mubr.f32.mxu0 %v538
    %719 = vmatmul.mubr.f32.gmra.mxu0 %v422
    %v720 = vpop.f32.mrf.mxu0
    %v721 = vadd.f32 %v633, %v720
    %v722 = vpop.f32.mrf.mxu0
    %723 = vmatprep.mubr.f32.mxu0 %v543
    %724 = vmatmul.mubr.f32.gmra.mxu0 %v423
    %v725 = vpop.f32.mrf.mxu0
    %v726 = vadd.f32 %v633, %v725
    %v727 = vpop.f32.mrf.mxu0
    %728 = vmatprep.mubr.f32.mxu0 %v548
    %729 = vmatmul.mubr.f32.gmra.mxu0 %v424
    %v730 = vpop.f32.mrf.mxu0
    %v731 = vadd.f32 %v633, %v730
    %v732 = vpop.f32.mrf.mxu0
    %733 = vmatprep.mubr.f32.mxu0 %v553
    %734 = vmatmul.mubr.f32.gmra.mxu0 %v425
    %v735 = vpop.f32.mrf.mxu0
    %v736 = vadd.f32 %v633, %v735
    %v737 = vpop.f32.mrf.mxu0
    %738 = vmatprep.mubr.f32.mxu0 %v558
    %739 = vmatmul.mubr.f32.gmra.mxu0 %v426
    %v740 = vpop.f32.mrf.mxu0
    %v741 = vadd.f32 %v633, %v740
    %v742 = vpop.f32.mrf.mxu0
    %743 = vmatprep.mubr.f32.mxu0 %v563
    %744 = vmatmul.mubr.f32.gmra.mxu0 %v427
    %v745 = vpop.f32.mrf.mxu0
    %v746 = vadd.f32 %v633, %v745
    %v747 = vpop.f32.mrf.mxu0
    %748 = vmatprep.mubr.f32.mxu0 %v568
    %749 = vmatmul.mubr.f32.gmra.mxu0 %v428
    %v750 = vpop.f32.mrf.mxu0
    %v751 = vadd.f32 %v633, %v750
    %v752 = vpop.f32.mrf.mxu0
    %753 = vmatprep.mubr.f32.mxu0 %v573
    %754 = vmatmul.mubr.f32.gmra.mxu0 %v429
    %v755 = vpop.f32.mrf.mxu0
    %v756 = vadd.f32 %v633, %v755
    %v757 = vpop.f32.mrf.mxu0
    %758 = vmatprep.mubr.f32.mxu0 %v578
    %759 = vmatmul.mubr.f32.gmra.mxu0 %v430
    %v760 = vpop.f32.mrf.mxu0
    %v761 = vadd.f32 %v633, %v760
    %v762 = vpop.f32.mrf.mxu0
    %763 = vmatprep.mubr.f32.mxu0 %v583
    %764 = vmatmul.mubr.f32.gmra.mxu0 %v431
    %v765 = vpop.f32.mrf.mxu0
    %v766 = vadd.f32 %v633, %v765
    %v767 = vpop.f32.mrf.mxu0
    %768 = vmatprep.mubr.f32.mxu0 %v588
    %769 = vmatmul.mubr.f32.gmra.mxu0 %v432
    %v770 = vpop.f32.mrf.mxu0
    %v771 = vadd.f32 %v633, %v770
    %v772 = vpop.f32.mrf.mxu0
    %773 = vmatprep.mubr.f32.mxu0 %v593
    %774 = vmatmul.mubr.f32.gmra.mxu0 %v433
    %v775 = vpop.f32.mrf.mxu0
    %v776 = vadd.f32 %v633, %v775
    %v777 = vpop.f32.mrf.mxu0
    %778 = vdwg.mxu0
    %779 = vst [vmem:[#allocation8] sm:$0xff] %v701
    %780 = vst [vmem:[#allocation8 + $0x8] sm:$0xff] %v706
    %781 = vst [vmem:[#allocation8 + $0x10] sm:$0xff] %v711
    %782 = vst [vmem:[#allocation8 + $0x18] sm:$0xff] %v716
    %783 = vst [vmem:[#allocation8 + $0x20] sm:$0xff] %v721
    %784 = vst [vmem:[#allocation8 + $0x28] sm:$0xff] %v726
    %785 = vst [vmem:[#allocation8 + $0x30] sm:$0xff] %v731
    %786 = vst [vmem:[#allocation8 + $0x38] sm:$0xff] %v736
    %787 = vst [vmem:[#allocation8 + $0x40] sm:$0xff] %v741
    %788 = vst [vmem:[#allocation8 + $0x48] sm:$0xff] %v746
    %789 = vst [vmem:[#allocation8 + $0x50] sm:$0xff] %v751
    %790 = vst [vmem:[#allocation8 + $0x58] sm:$0xff] %v756
    %791 = vst [vmem:[#allocation8 + $0x60] sm:$0xff] %v761
    %792 = vst [vmem:[#allocation8 + $0x68] sm:$0xff] %v766
    %793 = vst [vmem:[#allocation8 + $0x70] sm:$0xff] %v771
    %794 = vst [vmem:[#allocation8 + $0x78] sm:$0xff] %v776
    // Predicated region
    $region30: #{tpu_custom_call.1} parent=1 // pred_check
      _
    $region31: #{tpu_custom_call.1} parent=1 // pred_check_branch
      %796 = sbr.rel (0) target = $region33
    $region32: #{tpu_custom_call.1} parent=1 // pred_region
      %s798 = ssub.s32 2048, 2048
      %799 = vsyncadd [#allocation4], %s798
      %s800 = sshll.u32 [#allocation8], 4
      %s801 = int_to_ptr.vmem [resolvable:$true] %s800
      %806 = dma.vmem_to_hbm [thread:$0]  %s801, 2048, %s4, [#allocation4], 128, 128, 8
    $region33: #{tpu_custom_call.1} parent=1 // pred_fallthru
      _
    // Predicated region
    $region34: #{tpu_custom_call.1} parent=1 // pred_check
      _
    $region35: #{tpu_custom_call.1} parent=1 // pred_check_branch
      %808 = sbr.rel (0) target = $region37
    $region36: #{tpu_custom_call.1} parent=1 // pred_region
      %809 = dma.done [#allocation4], 2048
    $region37: #{tpu_custom_call.1} parent=1 // pred_fallthru
      _
    %810 = vsyncpa [#allocation3], 1
    %811 = vsyncpa [#allocation6], 1
    %812 = vsyncpa [#allocation4], 1

</llo_original>
